<compile_context>
chip_gen: v6e
topology: v6e:2x2x1
jax: 0.10.0
libtpu: 0.0.40
codegen_flags: <defaults>
</compile_context>

<pallas_src>
import jax
import jax.numpy as jnp
from jax.experimental import pallas as pl
from jax.experimental.pallas import tpu as pltpu

LANE = 128      # vreg lane width / MXU column width
SUBLANE = 8     # f32 sublane count


def _round_up(n, m):
    return ((n + m - 1) // m) * m


def _pad2(a, rows, cols):
    return jnp.pad(a, ((0, rows - a.shape[0]), (0, cols - a.shape[1])))


def _mlp_kernel(x_ref,
                w_in_ref, b_in_ref,
                w_h0_ref, b_h0_ref,
                w_h1_ref, b_h1_ref,
                w_out_ref, b_out_ref,
                o_ref):
    """Fused MLP tile: fc_input -> ReLU -> h0 -> ReLU -> h1 -> ReLU -> fc_output."""
    x = x_ref[...]                                   # (TB, Fp) bf16

    # fc_input + ReLU  (bf16 MXU matmul, f32 accumulate, f32 bias add)
    h = jnp.dot(x, w_in_ref[...], preferred_element_type=jnp.float32) + b_in_ref[...]
    h = jnp.maximum(h, 0.0)

    # hidden layer 0 + ReLU
    h = jnp.dot(h.astype(jnp.bfloat16), w_h0_ref[...],
                preferred_element_type=jnp.float32) + b_h0_ref[...]
    h = jnp.maximum(h, 0.0)

    # hidden layer 1 + ReLU
    h = jnp.dot(h.astype(jnp.bfloat16), w_h1_ref[...],
                preferred_element_type=jnp.float32) + b_h1_ref[...]
    h = jnp.maximum(h, 0.0)                          # (TB, Hp) f32

    # fc_output (out_features == 1): VPU multiply + cross-lane reduce instead of a
    # (TB,128)@(128,1) matmul that would use 1/128 of the MXU result columns.
    logit = jnp.sum(h * w_out_ref[...], axis=-1, keepdims=True) + b_out_ref[0]   # (TB, 1)

    # Lane-dense store: broadcast the logit across all 128 lanes; wrapper slices [:, :1].
    o_ref[...] = jnp.broadcast_to(logit, o_ref.shape).astype(o_ref.dtype)


def mlp_forward(x, params, *, tb=512):
    """Run the fused MLP Pallas kernel.

    x: (B, in_features) float32
    params: dict from init_params
    returns: (B, 1) float32 logits
    """
    B, F = x.shape
    H = params["w_in"].shape[1]

    Fp = _round_up(F, LANE)                 # pad feature dims to lane width
    Hp = _round_up(H, LANE)
    TB = _round_up(min(tb, _round_up(B, SUBLANE)), SUBLANE)   # batch tile
    Bp = _round_up(B, TB)
    grid = (pl.cdiv(Bp, TB),)

    # Zero-pad + cast matmul operands to bf16 in the wrapper (f32 accumulation in-kernel).
    xp    = _pad2(x, Bp, Fp).astype(jnp.bfloat16)
    w_in  = _pad2(params["w_in"], Fp, Hp).astype(jnp.bfloat16)
    b_in  = _pad2(params["b_in"], 1, Hp)                       # f32
    w_h0  = _pad2(params["w_h0"], Hp, Hp).astype(jnp.bfloat16)
    b_h0  = _pad2(params["b_h0"], 1, Hp)
    w_h1  = _pad2(params["w_h1"], Hp, Hp).astype(jnp.bfloat16)
    b_h1  = _pad2(params["b_h1"], 1, Hp)
    w_out = _pad2(params["w_out"].T, 1, Hp)                    # (1, Hp) f32, lane row
    b_out = params["b_out"].reshape(-1)                        # (1,) f32 scalar -> SMEM

    vmem = pltpu.MemorySpace.VMEM
    const = lambda i: (0, 0)                                   # weights stay VMEM-resident
    in_specs = [
        pl.BlockSpec((TB, Fp), lambda i: (i, 0), memory_space=vmem),   # x tile, pipelined
        pl.BlockSpec((Fp, Hp), const, memory_space=vmem),
        pl.BlockSpec((1, Hp), const, memory_space=vmem),
        pl.BlockSpec((Hp, Hp), const, memory_space=vmem),
        pl.BlockSpec((1, Hp), const, memory_space=vmem),
        pl.BlockSpec((Hp, Hp), const, memory_space=vmem),
        pl.BlockSpec((1, Hp), const, memory_space=vmem),
        pl.BlockSpec((1, Hp), const, memory_space=vmem),
        pl.BlockSpec(memory_space=pltpu.MemorySpace.SMEM),              # scalar output bias
    ]
    out_spec = pl.BlockSpec((TB, LANE), lambda i: (i, 0), memory_space=vmem)

    flops = 2 * Bp * (Fp * Hp + 2 * Hp * Hp + Hp)
    bytes_accessed = (xp.size * 2
                      + (w_in.size + w_h0.size + w_h1.size) * 2
                      + (b_in.size + b_h0.size + b_h1.size + w_out.size + b_out.size) * 4
                      + Bp * LANE * 4)

    out = pl.pallas_call(
        _mlp_kernel,
        grid=grid,
        in_specs=in_specs,
        out_specs=out_spec,
        out_shape=jax.ShapeDtypeStruct((Bp, LANE), jnp.float32),
        compiler_params=pltpu.CompilerParams(
            dimension_semantics=("parallel",)),
        cost_estimate=pl.CostEstimate(
            flops=flops, transcendentals=0, bytes_accessed=bytes_accessed),
    )(xp, w_in, b_in, w_h0, b_h0, w_h1, b_h1, w_out, b_out)

    return out[:B, :1]


def init_params(key, in_features, hidden, out_features=1):
    """Deterministic init mimicking torch.nn.Linear (uniform +-1/sqrt(fan_in)).

    Weights stored as (in_features, out_features) so the kernel computes x @ W + b.
    """
    def linear(k, fan_in, fan_out):
        kw, kb = jax.random.split(k)
        bound = 1.0 / jnp.sqrt(jnp.float32(fan_in))
        w = jax.random.uniform(kw, (fan_in, fan_out), jnp.float32, -bound, bound)
        b = jax.random.uniform(kb, (1, fan_out), jnp.float32, -bound, bound)
        return w, b

    k0, k1, k2, k3 = jax.random.split(key, 4)
    w_in, b_in = linear(k0, in_features, hidden)
    w_h0, b_h0 = linear(k1, hidden, hidden)
    w_h1, b_h1 = linear(k2, hidden, hidden)
    w_out, b_out = linear(k3, hidden, out_features)
    return {"w_in": w_in, "b_in": b_in,
            "w_h0": w_h0, "b_h0": b_h0,
            "w_h1": w_h1, "b_h1": b_h1,
            "w_out": w_out, "b_out": b_out}


def mlp_reference(x, p):
    """Pure-JAX reference matching the kernel's bf16-operand / f32-accumulate math."""
    def bf(a):
        return a.astype(jnp.bfloat16).astype(jnp.float32)
    h = jnp.maximum(bf(x) @ bf(p["w_in"]) + p["b_in"], 0.0)
    h = jnp.maximum(bf(h) @ bf(p["w_h0"]) + p["b_h0"], 0.0)
    h = jnp.maximum(bf(h) @ bf(p["w_h1"]) + p["b_h1"], 0.0)
    return jnp.sum(h * p["w_out"][:, 0][None, :], axis=-1, keepdims=True) + p["b_out"]


if __name__ == "__main__":
    key = jax.random.PRNGKey(0)
    k_x, k_p = jax.random.split(key)

    batch = 384          # small, but exercises a 3-step batch grid with tb=128
    in_features = 32     # zero-padded to 128 inside the wrapper
    hidden = 32

    x = jax.random.normal(k_x, (batch, in_features), jnp.float32)
    params = init_params(k_p, in_features, hidden)

    out = jax.block_until_ready(mlp_forward(x, params, tb=128))
    ref = mlp_reference(x, params)

    assert out.shape == (batch, 1)
    assert jnp.allclose(out, ref, atol=2e-2, rtol=2e-2), float(jnp.max(jnp.abs(out - ref)))

    print("KERNEL_OK")
</pallas_src>

<mosaic_0001>
module attributes {stable_mosaic.version = 11 : i64} {
  func.func @_mlp_kernel(%arg0: i32, %arg1: memref<128x128xbf16, #tpu.memory_space<vmem>>, %arg2: memref<128x128xbf16, #tpu.memory_space<vmem>>, %arg3: memref<1x128xf32, #tpu.memory_space<vmem>>, %arg4: memref<128x128xbf16, #tpu.memory_space<vmem>>, %arg5: memref<1x128xf32, #tpu.memory_space<vmem>>, %arg6: memref<128x128xbf16, #tpu.memory_space<vmem>>, %arg7: memref<1x128xf32, #tpu.memory_space<vmem>>, %arg8: memref<1x128xf32, #tpu.memory_space<vmem>>, %arg9: memref<1xf32, #tpu.memory_space<smem>>, %arg10: memref<128x128xf32, #tpu.memory_space<vmem>>) attributes {dimension_semantics = [#tpu.dimension_semantics<parallel>], iteration_bounds = array<i64: 3>, scalar_prefetch = 0 : i64, scratch_operands = 0 : i64, tpu.core_type = #tpu.core_type<tc>, window_params = [{transform_indices = @transform_0, window_bounds = array<i64: 128, 128>}, {pipeline_mode = #tpu.pipeline_mode<synchronous>, transform_indices = @transform_1, window_bounds = array<i64: 128, 128>}, {pipeline_mode = #tpu.pipeline_mode<synchronous>, transform_indices = @transform_2, window_bounds = array<i64: 1, 128>}, {pipeline_mode = #tpu.pipeline_mode<synchronous>, transform_indices = @transform_3, window_bounds = array<i64: 128, 128>}, {pipeline_mode = #tpu.pipeline_mode<synchronous>, transform_indices = @transform_4, window_bounds = array<i64: 1, 128>}, {pipeline_mode = #tpu.pipeline_mode<synchronous>, transform_indices = @transform_5, window_bounds = array<i64: 128, 128>}, {pipeline_mode = #tpu.pipeline_mode<synchronous>, transform_indices = @transform_6, window_bounds = array<i64: 1, 128>}, {pipeline_mode = #tpu.pipeline_mode<synchronous>, transform_indices = @transform_7, window_bounds = array<i64: 1, 128>}, {transform_indices = @transform_8, window_bounds = array<i64: 1>}, {transform_indices = @transform_9, window_bounds = array<i64: 128, 128>}]} {
    %c0 = arith.constant 0 : index
    %c0_0 = arith.constant 0 : index
    %0 = vector.load %arg1[%c0, %c0_0] : memref<128x128xbf16, #tpu.memory_space<vmem>>, vector<128x128xbf16>
    %c0_1 = arith.constant 0 : index
    %c0_2 = arith.constant 0 : index
    %1 = vector.load %arg2[%c0_1, %c0_2] : memref<128x128xbf16, #tpu.memory_space<vmem>>, vector<128x128xbf16>
    %cst = arith.constant dense<0.000000e+00> : vector<128x128xf32>
    %2 = tpu.matmul %0, %1, %cst {dimension_numbers = #tpu.dot_dimension_numbers<[1], [0], [0], [1], [0, 0, 1, 1], [], []>} : vector<128x128xbf16>, vector<128x128xbf16>, vector<128x128xf32> -> vector<128x128xf32>
    %c0_3 = arith.constant 0 : index
    %c0_4 = arith.constant 0 : index
    %3 = vector.load %arg3[%c0_3, %c0_4] : memref<1x128xf32, #tpu.memory_space<vmem>>, vector<1x128xf32>
    %4 = vector.broadcast %3 : vector<1x128xf32> to vector<128x128xf32>
    %5 = arith.addf %2, %4 : vector<128x128xf32>
    %cst_5 = arith.constant 0.000000e+00 : f32
    %6 = vector.broadcast %cst_5 : f32 to vector<128x128xf32>
    %7 = arith.maximumf %5, %6 : vector<128x128xf32>
    %8 = arith.truncf %7 : vector<128x128xf32> to vector<128x128xbf16>
    %c0_6 = arith.constant 0 : index
    %c0_7 = arith.constant 0 : index
    %9 = vector.load %arg4[%c0_6, %c0_7] : memref<128x128xbf16, #tpu.memory_space<vmem>>, vector<128x128xbf16>
    %cst_8 = arith.constant dense<0.000000e+00> : vector<128x128xf32>
    %10 = tpu.matmul %8, %9, %cst_8 {dimension_numbers = #tpu.dot_dimension_numbers<[1], [0], [0], [1], [0, 0, 1, 1], [], []>} : vector<128x128xbf16>, vector<128x128xbf16>, vector<128x128xf32> -> vector<128x128xf32>
    %c0_9 = arith.constant 0 : index
    %c0_10 = arith.constant 0 : index
    %11 = vector.load %arg5[%c0_9, %c0_10] : memref<1x128xf32, #tpu.memory_space<vmem>>, vector<1x128xf32>
    %12 = vector.broadcast %11 : vector<1x128xf32> to vector<128x128xf32>
    %13 = arith.addf %10, %12 : vector<128x128xf32>
    %cst_11 = arith.constant 0.000000e+00 : f32
    %14 = vector.broadcast %cst_11 : f32 to vector<128x128xf32>
    %15 = arith.maximumf %13, %14 : vector<128x128xf32>
    %16 = arith.truncf %15 : vector<128x128xf32> to vector<128x128xbf16>
    %c0_12 = arith.constant 0 : index
    %c0_13 = arith.constant 0 : index
    %17 = vector.load %arg6[%c0_12, %c0_13] : memref<128x128xbf16, #tpu.memory_space<vmem>>, vector<128x128xbf16>
    %cst_14 = arith.constant dense<0.000000e+00> : vector<128x128xf32>
    %18 = tpu.matmul %16, %17, %cst_14 {dimension_numbers = #tpu.dot_dimension_numbers<[1], [0], [0], [1], [0, 0, 1, 1], [], []>} : vector<128x128xbf16>, vector<128x128xbf16>, vector<128x128xf32> -> vector<128x128xf32>
    %c0_15 = arith.constant 0 : index
    %c0_16 = arith.constant 0 : index
    %19 = vector.load %arg7[%c0_15, %c0_16] : memref<1x128xf32, #tpu.memory_space<vmem>>, vector<1x128xf32>
    %20 = vector.broadcast %19 : vector<1x128xf32> to vector<128x128xf32>
    %21 = arith.addf %18, %20 : vector<128x128xf32>
    %cst_17 = arith.constant 0.000000e+00 : f32
    %22 = vector.broadcast %cst_17 : f32 to vector<128x128xf32>
    %23 = arith.maximumf %21, %22 : vector<128x128xf32>
    %c0_18 = arith.constant 0 : index
    %c0_19 = arith.constant 0 : index
    %24 = vector.load %arg8[%c0_18, %c0_19] : memref<1x128xf32, #tpu.memory_space<vmem>>, vector<1x128xf32>
    %25 = vector.broadcast %24 : vector<1x128xf32> to vector<128x128xf32>
    %26 = arith.mulf %23, %25 : vector<128x128xf32>
    %cst_20 = arith.constant dense<0.000000e+00> : vector<128xf32>
    %27 = vector.multi_reduction <add>, %26, %cst_20 [1] : vector<128x128xf32> to vector<128xf32>
    %28 = vector.shape_cast %27 : vector<128xf32> to vector<128x1xf32>
    %c0_21 = arith.constant 0 : index
    %29 = memref.load %arg9[%c0_21] : memref<1xf32, #tpu.memory_space<smem>>
    %30 = vector.broadcast %29 : f32 to vector<128x1xf32>
    %31 = arith.addf %28, %30 : vector<128x1xf32>
    %32 = vector.shape_cast %31 : vector<128x1xf32> to vector<128x1xf32>
    %33 = vector.broadcast %32 : vector<128x1xf32> to vector<128x128xf32>
    %c0_22 = arith.constant 0 : index
    %c0_23 = arith.constant 0 : index
    %34 = vector.load %arg10[%c0_22, %c0_23] : memref<128x128xf32, #tpu.memory_space<vmem>>, vector<128x128xf32>
    tpu.vector_store %arg10[%c0_22, %c0_23], %33 {strides = array<i32>} : memref<128x128xf32, #tpu.memory_space<vmem>>, vector<128x128xf32>,
    return
  }
  func.func @transform_0(%arg0: i32) -> (i32, i32) {
    %c0_i32 = arith.constant 0 : i32
    %c0_i32_0 = arith.constant 0 : i32
    return %arg0, %c0_i32 : i32, i32
  }
  func.func @transform_1(%arg0: i32) -> (i32, i32) {
    %c0_i32 = arith.constant 0 : i32
    %c0_i32_0 = arith.constant 0 : i32
    %c0_i32_1 = arith.constant 0 : i32
    return %c0_i32, %c0_i32_0 : i32, i32
  }
  func.func @transform_2(%arg0: i32) -> (i32, i32) {
    %c0_i32 = arith.constant 0 : i32
    %c0_i32_0 = arith.constant 0 : i32
    %c0_i32_1 = arith.constant 0 : i32
    return %c0_i32, %c0_i32_0 : i32, i32
  }
  func.func @transform_3(%arg0: i32) -> (i32, i32) {
    %c0_i32 = arith.constant 0 : i32
    %c0_i32_0 = arith.constant 0 : i32
    %c0_i32_1 = arith.constant 0 : i32
    return %c0_i32, %c0_i32_0 : i32, i32
  }
  func.func @transform_4(%arg0: i32) -> (i32, i32) {
    %c0_i32 = arith.constant 0 : i32
    %c0_i32_0 = arith.constant 0 : i32
    %c0_i32_1 = arith.constant 0 : i32
    return %c0_i32, %c0_i32_0 : i32, i32
  }
  func.func @transform_5(%arg0: i32) -> (i32, i32) {
    %c0_i32 = arith.constant 0 : i32
    %c0_i32_0 = arith.constant 0 : i32
    %c0_i32_1 = arith.constant 0 : i32
    return %c0_i32, %c0_i32_0 : i32, i32
  }
  func.func @transform_6(%arg0: i32) -> (i32, i32) {
    %c0_i32 = arith.constant 0 : i32
    %c0_i32_0 = arith.constant 0 : i32
    %c0_i32_1 = arith.constant 0 : i32
    return %c0_i32, %c0_i32_0 : i32, i32
  }
  func.func @transform_7(%arg0: i32) -> (i32, i32) {
    %c0_i32 = arith.constant 0 : i32
    %c0_i32_0 = arith.constant 0 : i32
    %c0_i32_1 = arith.constant 0 : i32
    return %c0_i32, %c0_i32_0 : i32, i32
  }
  func.func @transform_8(%arg0: i32) -> i32 {
    %c0_i32 = arith.constant 0 : i32
    %c0_i32_0 = arith.constant 0 : i32
    return %c0_i32 : i32
  }
  func.func @transform_9(%arg0: i32) -> (i32, i32) {
    %c0_i32 = arith.constant 0 : i32
    %c0_i32_0 = arith.constant 0 : i32
    return %arg0, %c0_i32 : i32, i32
  }
}

</mosaic_0001>

<llo_original>
// kernel: tpu_custom_call.1
$region0: #{tpu_custom_call.1}
  #allocation0 [shape = 'u32[]', space=smem, size = 0x4, offset = 0x4, fixed_abs, tag = 'smem constant byte address 0x4 - core index']
  #allocation1 [shape = 'u32[144,128]{1,0:T(1,128)}', space=vmem, size = 0x12000, scoped, tag = 'internal scratch']
  #allocation2 [shape = 'f32[1]{0:T(128)S(6)}', space=smem, size = 0x200, scoped, tag = 'scoped memory for tpu_custom_call.1']
  %s0 = inlined_call_operand.hbm [shape: bf16[384,128], index: 0, kind: input, shape index: {}]
  %s1 = inlined_call_operand.hbm [shape: bf16[128,128], index: 1, kind: input, shape index: {}]
  %s2 = inlined_call_operand.vmem [shape: f32[1,128], index: 2, kind: input, shape index: {}]
  %s3 = inlined_call_operand.hbm [shape: bf16[128,128], index: 3, kind: input, shape index: {}]
  %s4 = inlined_call_operand.vmem [shape: f32[1,128], index: 4, kind: input, shape index: {}]
  %s5 = inlined_call_operand.hbm [shape: bf16[128,128], index: 5, kind: input, shape index: {}]
  %s6 = inlined_call_operand.vmem [shape: f32[1,128], index: 6, kind: input, shape index: {}]
  %s7 = inlined_call_operand.vmem [shape: f32[1,128], index: 7, kind: input, shape index: {}]
  %s8 = inlined_call_operand.<no memory space> [shape: f32[1], index: 8, kind: input, shape index: {}]
  %s9 = inlined_call_operand.hbm [shape: f32[384,128], index: 9, kind: output, shape index: {}]
  %s10 = sld [smem:[#allocation0]]
  $region85: #{tpu_custom_call.1} parent=0
    _
  %s12 = ssub.s32 1, %s10
  %s13 = scalar_select 0, %s12, %s10
  %14 = sst [smem:[#allocation2]] %s8
  $region1: #{tpu_custom_call.1} parent=0
    #allocation3 [shape = 'u8[65536]{0}', space=vmem, size = 0x10000, scoped, tag = 'input window, operand 0']
    #allocation4 [shape = 's32[2]{0}', space=sflag, size = 0x8, scoped, tag = 'scoped memory for tpu_custom_call.1']
    #allocation5 [shape = 's32[2]{0}', space=sflag, size = 0x8, scoped, tag = 'scoped memory for tpu_custom_call.1']
    #allocation6 [shape = 'u8[32768]{0}', space=vmem, size = 0x8000, scoped, tag = 'input window, operand 1, single buffered']
    #allocation7 [shape = 's32[1]{0}', space=sflag, size = 0x4, scoped, tag = 'scoped memory for tpu_custom_call.1']
    #allocation8 [shape = 'u8[32768]{0}', space=vmem, size = 0x8000, scoped, tag = 'input window, operand 3, single buffered']
    #allocation9 [shape = 'u8[32768]{0}', space=vmem, size = 0x8000, scoped, tag = 'input window, operand 5, single buffered']
    #allocation10 [shape = 's32[1]{0}', space=sflag, size = 0x4, scoped, tag = 'scoped memory for tpu_custom_call.1']
    #allocation11 [shape = 'u8[131072]{0}', space=vmem, size = 0x20000, scoped, tag = 'output window, operand 0']
    %15 = vsyncpa [#allocation4], 0
    %s16 = scalar_lea.sflag [#allocation4], 1
    %17 = vsyncpa %s16, 0
    %18 = vsyncpa [#allocation7], 0
    %19 = vsyncpa [#allocation10], 0
    %20 = vsyncpa [#allocation5], 0
    %s21 = scalar_lea.sflag [#allocation5], 1
    %22 = vsyncpa %s21, 0
    loop: start=0, step=1, limit=5
    $region2: #{tpu_custom_call.1} parent=1 // loop_pre_header
      _
    $region3: #{tpu_custom_call.1} parent=1 // loop_header
      %s24 = sphi 0, %s28
      %p25 = scmp.ge.s32.totalorder %s24, 5
      %s34 = sphi 0, %s36
      %s37 = sphi 0, %s34
      %s38 = sphi 0, %s37
      %s54 = sphi 0, %s38
      %s58 = sphi 0, %s58
      %s60 = sphi 0, %s58
      %s61 = sphi 0, %s60
      %s75 = sphi 0, %s61
      %s79 = sphi 0, %s79
      %s81 = sphi 0, %s79
      %s82 = sphi 0, %s81
      %s96 = sphi 0, %s82
      %s100 = sphi 0, %s100
      %s102 = sphi 0, %s100
      %s103 = sphi 0, %s102
      %s117 = sphi 0, %s103
      %s121 = sphi 0, %s121
      %s123 = sphi 0, %s121
      %s124 = sphi 0, %s123
      %s138 = sphi 0, %s124
      %s142 = sphi 0, %s142
      %s144 = sphi 0, %s142
      %s145 = sphi 0, %s144
      %s159 = sphi 0, %s145
      %s163 = sphi 0, %s163
      %s165 = sphi 0, %s163
      %s166 = sphi 0, %s165
      %s180 = sphi 0, %s166
      %s184 = sphi 0, %s184
      %s186 = sphi 0, %s184
      %s187 = sphi 0, %s186
      %s201 = sphi 0, %s187
      %s205 = sphi 0, %s205
      %s207 = sphi 0, %s205
      %s208 = sphi 0, %s207
      %s222 = sphi 0, %s208
      %s228 = sphi 0, %s230
      %s231 = sphi 0, %s228
      %s232 = sphi 0, %s231
      %s248 = sphi 0, %s232
    $region4: #{tpu_custom_call.1} parent=1 // loop_header_branch
      %27 = sbr.rel (%p25) target = $region8
    $region5: #{tpu_custom_call.1} parent=1 // loop_body
      %s29 = ssub.s32 %s24, 1
      %s30 = ssub.s32 %s24, 2
      %s31 = sadd.s32 %s24, 1
      %s32 = ssub.s32 %s24, %s31
      %p33 = scmp.eq.s32.totalorder %s32, 0
      %s35 = sadd.s32 %s34, 1
      %s36 = scalar_select %p33, %s34, %s35
      %p39 = pneg %p33
      %p40 = scmp.eq.s32.totalorder %s24, 2
      %p41 = por %p39, %p40
      %p42 = scmp.ne.s32.totalorder %s34, %s37
      %p43 = scmp.eq.s32.totalorder %s24, 0
      %p44 = por %p42, %p43
      %p45 = scmp.ne.s32.totalorder %s34, %s37
      %p46 = scmp.eq.s32.totalorder %s29, 2
      %p47 = por %p45, %p46
      %p48 = scmp.ne.s32.totalorder %s37, %s38
      %p49 = scmp.eq.s32.totalorder %s29, 0
      %p50 = por %p48, %p49
      %p51 = scmp.ne.s32.totalorder %s37, %s38
      %p52 = scmp.eq.s32.totalorder %s30, 2
      %p53 = por %p51, %p52
      %p55 = scmp.ne.s32.totalorder %s38, %s54
      %p56 = scmp.eq.s32.totalorder %s30, 0
      %p57 = por %p55, %p56
      %s59 = sadd.s32 %s58, 1
      %p62 = scmp.eq.s32.totalorder %s24, 2
      %p63 = scmp.ne.s32.totalorder %s58, %s60
      %p64 = scmp.eq.s32.totalorder %s24, 0
      %p65 = por %p63, %p64
      %p66 = scmp.ne.s32.totalorder %s58, %s60
      %p67 = scmp.eq.s32.totalorder %s29, 2
      %p68 = por %p66, %p67
      %p69 = scmp.ne.s32.totalorder %s60, %s61
      %p70 = scmp.eq.s32.totalorder %s29, 0
      %p71 = por %p69, %p70
      %p72 = scmp.ne.s32.totalorder %s60, %s61
      %p73 = scmp.eq.s32.totalorder %s30, 2
      %p74 = por %p72, %p73
      %p76 = scmp.ne.s32.totalorder %s61, %s75
      %p77 = scmp.eq.s32.totalorder %s30, 0
      %p78 = por %p76, %p77
      %s80 = sadd.s32 %s79, 1
      %p83 = scmp.eq.s32.totalorder %s24, 2
      %p84 = scmp.ne.s32.totalorder %s79, %s81
      %p85 = scmp.eq.s32.totalorder %s24, 0
      %p86 = por %p84, %p85
      %p87 = scmp.ne.s32.totalorder %s79, %s81
      %p88 = scmp.eq.s32.totalorder %s29, 2
      %p89 = por %p87, %p88
      %p90 = scmp.ne.s32.totalorder %s81, %s82
      %p91 = scmp.eq.s32.totalorder %s29, 0
      %p92 = por %p90, %p91
      %p93 = scmp.ne.s32.totalorder %s81, %s82
      %p94 = scmp.eq.s32.totalorder %s30, 2
      %p95 = por %p93, %p94
      %p97 = scmp.ne.s32.totalorder %s82, %s96
      %p98 = scmp.eq.s32.totalorder %s30, 0
      %p99 = por %p97, %p98
      %s101 = sadd.s32 %s100, 1
      %p104 = scmp.eq.s32.totalorder %s24, 2
      %p105 = scmp.ne.s32.totalorder %s100, %s102
      %p106 = scmp.eq.s32.totalorder %s24, 0
      %p107 = por %p105, %p106
      %p108 = scmp.ne.s32.totalorder %s100, %s102
      %p109 = scmp.eq.s32.totalorder %s29, 2
      %p110 = por %p108, %p109
      %p111 = scmp.ne.s32.totalorder %s102, %s103
      %p112 = scmp.eq.s32.totalorder %s29, 0
      %p113 = por %p111, %p112
      %p114 = scmp.ne.s32.totalorder %s102, %s103
      %p115 = scmp.eq.s32.totalorder %s30, 2
      %p116 = por %p114, %p115
      %p118 = scmp.ne.s32.totalorder %s103, %s117
      %p119 = scmp.eq.s32.totalorder %s30, 0
      %p120 = por %p118, %p119
      %s122 = sadd.s32 %s121, 1
      %p125 = scmp.eq.s32.totalorder %s24, 2
      %p126 = scmp.ne.s32.totalorder %s121, %s123
      %p127 = scmp.eq.s32.totalorder %s24, 0
      %p128 = por %p126, %p127
      %p129 = scmp.ne.s32.totalorder %s121, %s123
      %p130 = scmp.eq.s32.totalorder %s29, 2
      %p131 = por %p129, %p130
      %p132 = scmp.ne.s32.totalorder %s123, %s124
      %p133 = scmp.eq.s32.totalorder %s29, 0
      %p134 = por %p132, %p133
      %p135 = scmp.ne.s32.totalorder %s123, %s124
      %p136 = scmp.eq.s32.totalorder %s30, 2
      %p137 = por %p135, %p136
      %p139 = scmp.ne.s32.totalorder %s124, %s138
      %p140 = scmp.eq.s32.totalorder %s30, 0
      %p141 = por %p139, %p140
      %s143 = sadd.s32 %s142, 1
      %p146 = scmp.eq.s32.totalorder %s24, 2
      %p147 = scmp.ne.s32.totalorder %s142, %s144
      %p148 = scmp.eq.s32.totalorder %s24, 0
      %p149 = por %p147, %p148
      %p150 = scmp.ne.s32.totalorder %s142, %s144
      %p151 = scmp.eq.s32.totalorder %s29, 2
      %p152 = por %p150, %p151
      %p153 = scmp.ne.s32.totalorder %s144, %s145
      %p154 = scmp.eq.s32.totalorder %s29, 0
      %p155 = por %p153, %p154
      %p156 = scmp.ne.s32.totalorder %s144, %s145
      %p157 = scmp.eq.s32.totalorder %s30, 2
      %p158 = por %p156, %p157
      %p160 = scmp.ne.s32.totalorder %s145, %s159
      %p161 = scmp.eq.s32.totalorder %s30, 0
      %p162 = por %p160, %p161
      %s164 = sadd.s32 %s163, 1
      %p167 = scmp.eq.s32.totalorder %s24, 2
      %p168 = scmp.ne.s32.totalorder %s163, %s165
      %p169 = scmp.eq.s32.totalorder %s24, 0
      %p170 = por %p168, %p169
      %p171 = scmp.ne.s32.totalorder %s163, %s165
      %p172 = scmp.eq.s32.totalorder %s29, 2
      %p173 = por %p171, %p172
      %p174 = scmp.ne.s32.totalorder %s165, %s166
      %p175 = scmp.eq.s32.totalorder %s29, 0
      %p176 = por %p174, %p175
      %p177 = scmp.ne.s32.totalorder %s165, %s166
      %p178 = scmp.eq.s32.totalorder %s30, 2
      %p179 = por %p177, %p178
      %p181 = scmp.ne.s32.totalorder %s166, %s180
      %p182 = scmp.eq.s32.totalorder %s30, 0
      %p183 = por %p181, %p182
      %s185 = sadd.s32 %s184, 1
      %p188 = scmp.eq.s32.totalorder %s24, 2
      %p189 = scmp.ne.s32.totalorder %s184, %s186
      %p190 = scmp.eq.s32.totalorder %s24, 0
      %p191 = por %p189, %p190
      %p192 = scmp.ne.s32.totalorder %s184, %s186
      %p193 = scmp.eq.s32.totalorder %s29, 2
      %p194 = por %p192, %p193
      %p195 = scmp.ne.s32.totalorder %s186, %s187
      %p196 = scmp.eq.s32.totalorder %s29, 0
      %p197 = por %p195, %p196
      %p198 = scmp.ne.s32.totalorder %s186, %s187
      %p199 = scmp.eq.s32.totalorder %s30, 2
      %p200 = por %p198, %p199
      %p202 = scmp.ne.s32.totalorder %s187, %s201
      %p203 = scmp.eq.s32.totalorder %s30, 0
      %p204 = por %p202, %p203
      %s206 = sadd.s32 %s205, 1
      %p209 = scmp.eq.s32.totalorder %s24, 2
      %p210 = scmp.ne.s32.totalorder %s205, %s207
      %p211 = scmp.eq.s32.totalorder %s24, 0
      %p212 = por %p210, %p211
      %p213 = scmp.ne.s32.totalorder %s205, %s207
      %p214 = scmp.eq.s32.totalorder %s29, 2
      %p215 = por %p213, %p214
      %p216 = scmp.ne.s32.totalorder %s207, %s208
      %p217 = scmp.eq.s32.totalorder %s29, 0
      %p218 = por %p216, %p217
      %p219 = scmp.ne.s32.totalorder %s207, %s208
      %p220 = scmp.eq.s32.totalorder %s30, 2
      %p221 = por %p219, %p220
      %p223 = scmp.ne.s32.totalorder %s208, %s222
      %p224 = scmp.eq.s32.totalorder %s30, 0
      %p225 = por %p223, %p224
      %s226 = ssub.s32 %s24, %s31
      %p227 = scmp.eq.s32.totalorder %s226, 0
      %s229 = sadd.s32 %s228, 1
      %s230 = scalar_select %p227, %s228, %s229
      %p233 = pneg %p227
      %p234 = scmp.eq.s32.totalorder %s24, 2
      %p235 = por %p233, %p234
      %p236 = scmp.ne.s32.totalorder %s228, %s231
      %p237 = scmp.eq.s32.totalorder %s24, 0
      %p238 = por %p236, %p237
      %p239 = scmp.ne.s32.totalorder %s228, %s231
      %p240 = scmp.eq.s32.totalorder %s29, 2
      %p241 = por %p239, %p240
      %p242 = scmp.ne.s32.totalorder %s231, %s232
      %p243 = scmp.eq.s32.totalorder %s29, 0
      %p244 = por %p242, %p243
      %p245 = scmp.ne.s32.totalorder %s231, %s232
      %p246 = scmp.eq.s32.totalorder %s30, 2
      %p247 = por %p245, %p246
      %p249 = scmp.ne.s32.totalorder %s232, %s248
      %p250 = scmp.eq.s32.totalorder %s30, 0
      %p251 = por %p249, %p250
      %p252 = scmp.le.s32.totalorder 1, %s24
      %p253 = scmp.lt.s32.totalorder %s24, 4
      %p254 = pnand %p252, %p253
      %p255 = pneg %p254
      // Predicated region
      $region9: #{tpu_custom_call.1} parent=5 // pred_check
        _
      $region10: #{tpu_custom_call.1} parent=5 // pred_check_branch
        %257 = sbr.rel (%p254) target = $region12
      $region11: #{tpu_custom_call.1} parent=5 // pred_region
        %s258 = ssub.s32 %s24, 1
        // Predicated region
        $region13: #{tpu_custom_call.1} parent=11 // pred_check
          %p259 = pneg %p71
        $region14: #{tpu_custom_call.1} parent=11 // pred_check_branch
          %261 = sbr.rel (%p259) target = $region16
        $region15: #{tpu_custom_call.1} parent=11 // pred_region
          %s263 = ssub.s32 1024, 1024
          %264 = vsyncadd [#allocation7], %s263
          %s265 = sshll.u32 [#allocation6], 4
          %s266 = int_to_ptr.vmem [resolvable:$true] %s265
          %271 = dma.hbm_to_vmem [thread:$0]  %s1, 1024, %s266, [#allocation7], 64, 64, 4
        $region16: #{tpu_custom_call.1} parent=11 // pred_fallthru
          _
        // Predicated region
        $region17: #{tpu_custom_call.1} parent=11 // pred_check
          %p272 = pneg %p92
        $region18: #{tpu_custom_call.1} parent=11 // pred_check_branch
          %274 = sbr.rel (%p272) target = $region20
        $region19: #{tpu_custom_call.1} parent=11 // pred_region
          _
        $region20: #{tpu_custom_call.1} parent=11 // pred_fallthru
          _
        // Predicated region
        $region21: #{tpu_custom_call.1} parent=11 // pred_check
          %p275 = pneg %p113
        $region22: #{tpu_custom_call.1} parent=11 // pred_check_branch
          %277 = sbr.rel (%p275) target = $region24
        $region23: #{tpu_custom_call.1} parent=11 // pred_region
          %s279 = ssub.s32 1024, 1024
          %280 = vsyncadd [#allocation7], %s279
          %s281 = sshll.u32 [#allocation8], 4
          %s282 = int_to_ptr.vmem [resolvable:$true] %s281
          %287 = dma.hbm_to_vmem [thread:$0]  %s3, 1024, %s282, [#allocation7], 64, 64, 4
        $region24: #{tpu_custom_call.1} parent=11 // pred_fallthru
          _
        // Predicated region
        $region25: #{tpu_custom_call.1} parent=11 // pred_check
          %p288 = pneg %p134
        $region26: #{tpu_custom_call.1} parent=11 // pred_check_branch
          %290 = sbr.rel (%p288) target = $region28
        $region27: #{tpu_custom_call.1} parent=11 // pred_region
          _
        $region28: #{tpu_custom_call.1} parent=11 // pred_fallthru
          _
        // Predicated region
        $region29: #{tpu_custom_call.1} parent=11 // pred_check
          %p291 = pneg %p155
        $region30: #{tpu_custom_call.1} parent=11 // pred_check_branch
          %293 = sbr.rel (%p291) target = $region32
        $region31: #{tpu_custom_call.1} parent=11 // pred_region
          %s295 = ssub.s32 1024, 1024
          %296 = vsyncadd [#allocation10], %s295
          %s297 = sshll.u32 [#allocation9], 4
          %s298 = int_to_ptr.vmem [resolvable:$true] %s297
          %303 = dma.hbm_to_vmem [thread:$0]  %s5, 1024, %s298, [#allocation10], 64, 64, 4
        $region32: #{tpu_custom_call.1} parent=11 // pred_fallthru
          _
        // Predicated region
        $region33: #{tpu_custom_call.1} parent=11 // pred_check
          %p304 = pneg %p176
        $region34: #{tpu_custom_call.1} parent=11 // pred_check_branch
          %306 = sbr.rel (%p304) target = $region36
        $region35: #{tpu_custom_call.1} parent=11 // pred_region
          _
        $region36: #{tpu_custom_call.1} parent=11 // pred_fallthru
          _
        // Predicated region
        $region37: #{tpu_custom_call.1} parent=11 // pred_check
          %p307 = pneg %p197
        $region38: #{tpu_custom_call.1} parent=11 // pred_check_branch
          %309 = sbr.rel (%p307) target = $region40
        $region39: #{tpu_custom_call.1} parent=11 // pred_region
          _
        $region40: #{tpu_custom_call.1} parent=11 // pred_fallthru
          _
        // Predicated region
        $region41: #{tpu_custom_call.1} parent=11 // pred_check
          %p310 = pneg %p218
        $region42: #{tpu_custom_call.1} parent=11 // pred_check_branch
          %312 = sbr.rel (%p310) target = $region44
        $region43: #{tpu_custom_call.1} parent=11 // pred_region
          _
        $region44: #{tpu_custom_call.1} parent=11 // pred_fallthru
          _
      $region12: #{tpu_custom_call.1} parent=5 // pred_fallthru
        _
      %p313 = scmp.lt.s32.totalorder %s24, 3
      // Predicated region
      $region45: #{tpu_custom_call.1} parent=5 // pred_check
        %p314 = pneg %p313
      $region46: #{tpu_custom_call.1} parent=5 // pred_check_branch
        %316 = sbr.rel (%p314) target = $region48
      $region47: #{tpu_custom_call.1} parent=5 // pred_region
        // Predicated region
        $region49: #{tpu_custom_call.1} parent=47 // pred_check
          %p317 = pneg %p44
        $region50: #{tpu_custom_call.1} parent=47 // pred_check_branch
          %319 = sbr.rel (%p317) target = $region52
        $region51: #{tpu_custom_call.1} parent=47 // pred_region
          %s320 = sand.u32 %s34, 1
          %s321 = scalar_lea.sflag [#allocation4], %s320
          %s322 = sand.u32 %s34, 1
          %s323 = smul.addr %s322, 64
          %s324 = scalar_lea.vmem [#allocation3], %s323
          %s325 = smul.u32 16, %s24
          %s327 = ssub.s32 1024, 1024
          %328 = vsyncadd %s321, %s327
          %s329 = smul.addr %s325, 64
          %s330 = scalar_lea.hbm %s0, %s329
          %s331 = sshll.u32 %s324, 4
          %s332 = int_to_ptr.vmem [resolvable:$true] %s331
          %337 = dma.hbm_to_vmem [thread:$0]  %s330, 1024, %s332, %s321, 64, 64, 4
        $region52: #{tpu_custom_call.1} parent=47 // pred_fallthru
          _
      $region48: #{tpu_custom_call.1} parent=5 // pred_fallthru
        _
      %p338 = scmp.le.s32.totalorder 1, %s24
      %p339 = scmp.lt.s32.totalorder %s24, 4
      %p340 = pnand %p338, %p339
      %p341 = pneg %p340
      // Predicated region
      $region53: #{tpu_custom_call.1} parent=5 // pred_check
        _
      $region54: #{tpu_custom_call.1} parent=5 // pred_check_branch
        %343 = sbr.rel (%p340) target = $region56
      $region55: #{tpu_custom_call.1} parent=5 // pred_region
        %s344 = ssub.s32 %s24, 1
        %s345 = sand.u32 %s37, 1
        %s346 = scalar_lea.sflag [#allocation4], %s345
        %s347 = sand.u32 %s37, 1
        %s348 = smul.addr %s347, 64
        %s349 = scalar_lea.vmem [#allocation3], %s348
        // Predicated region
        $region57: #{tpu_custom_call.1} parent=55 // pred_check
          %p350 = pneg %p50
        $region58: #{tpu_custom_call.1} parent=55 // pred_check_branch
          %352 = sbr.rel (%p350) target = $region60
        $region59: #{tpu_custom_call.1} parent=55 // pred_region
          %353 = dma.done %s346, 1024
        $region60: #{tpu_custom_call.1} parent=55 // pred_fallthru
          _
        // Predicated region
        $region61: #{tpu_custom_call.1} parent=55 // pred_check
          %p354 = pneg %p71
        $region62: #{tpu_custom_call.1} parent=55 // pred_check_branch
          %356 = sbr.rel (%p354) target = $region64
        $region63: #{tpu_custom_call.1} parent=55 // pred_region
          %357 = dma.done [#allocation7], 1024
        $region64: #{tpu_custom_call.1} parent=55 // pred_fallthru
          _
        // Predicated region
        $region65: #{tpu_custom_call.1} parent=55 // pred_check
          %p358 = pneg %p113
        $region66: #{tpu_custom_call.1} parent=55 // pred_check_branch
          %360 = sbr.rel (%p358) target = $region68
        $region67: #{tpu_custom_call.1} parent=55 // pred_region
          %361 = dma.done [#allocation7], 1024
        $region68: #{tpu_custom_call.1} parent=55 // pred_fallthru
          _
        // Predicated region
        $region69: #{tpu_custom_call.1} parent=55 // pred_check
          %p362 = pneg %p155
        $region70: #{tpu_custom_call.1} parent=55 // pred_check_branch
          %364 = sbr.rel (%p362) target = $region72
        $region71: #{tpu_custom_call.1} parent=55 // pred_region
          %365 = dma.done [#allocation10], 1024
        $region72: #{tpu_custom_call.1} parent=55 // pred_fallthru
          _
        %s366 = sand.u32 %s37, 1
        %s367 = scalar_lea.sflag [#allocation4], %s366
        %s368 = sand.u32 %s37, 1
        %s369 = smul.addr %s368, 64
        %s370 = scalar_lea.vmem [#allocation3], %s369
        %p371 = pneg %p50
        %p372 = pneg %p47
        %p373 = pneg %p71
        %p374 = pneg %p68
        %p375 = pneg %p92
        %p376 = pneg %p89
        %p377 = pneg %p113
        %p378 = pneg %p110
        %p379 = pneg %p134
        %p380 = pneg %p131
        %p381 = pneg %p155
        %p382 = pneg %p152
        %p383 = pneg %p176
        %p384 = pneg %p173
        %p385 = pneg %p197
        %p386 = pneg %p194
        %p387 = pneg %p218
        %p388 = pneg %p215
        %p389 = pneg %p244
        %p390 = pneg %p241
        %s391 = sand.u32 %s231, 1
        %s392 = scalar_lea.sflag [#allocation5], %s391
        %s393 = sand.u32 %s231, 1
        %s394 = smul.addr %s393, 128
        %s395 = scalar_lea.vmem [#allocation11], %s394
        %s396 = smul.u32 16, %s29
        %s397 = smul.u32 16, %s29
        %v399 = vld [vmem:[%s349] sm:$0xf]
        %v400 = vld [vmem:[%s349 + $0x4] sm:$0xf]
        %v401 = vld [vmem:[%s349 + $0x8] sm:$0xf]
        %v402 = vld [vmem:[%s349 + $0xc] sm:$0xf]
        %v403 = vld [vmem:[%s349 + $0x10] sm:$0xf]
        %v404 = vld [vmem:[%s349 + $0x14] sm:$0xf]
        %v405 = vld [vmem:[%s349 + $0x18] sm:$0xf]
        %v406 = vld [vmem:[%s349 + $0x1c] sm:$0xf]
        %v407 = vld [vmem:[%s349 + $0x20] sm:$0xf]
        %v408 = vld [vmem:[%s349 + $0x24] sm:$0xf]
        %v409 = vld [vmem:[%s349 + $0x28] sm:$0xf]
        %v410 = vld [vmem:[%s349 + $0x2c] sm:$0xf]
        %v411 = vld [vmem:[%s349 + $0x30] sm:$0xf]
        %v412 = vld [vmem:[%s349 + $0x34] sm:$0xf]
        %v413 = vld [vmem:[%s349 + $0x38] sm:$0xf]
        %v414 = vld [vmem:[%s349 + $0x3c] sm:$0xf]
        %v415 = vld [vmem:[#allocation6] sm:$0xf]
        %v416 = vld [vmem:[#allocation6 + $0x4] sm:$0xf]
        %v417 = vld [vmem:[#allocation6 + $0x8] sm:$0xf]
        %v418 = vld [vmem:[#allocation6 + $0xc] sm:$0xf]
        %v419 = vld [vmem:[#allocation6 + $0x10] sm:$0xf]
        %v420 = vld [vmem:[#allocation6 + $0x14] sm:$0xf]
        %v421 = vld [vmem:[#allocation6 + $0x18] sm:$0xf]
        %v422 = vld [vmem:[#allocation6 + $0x1c] sm:$0xf]
        %v423 = vld [vmem:[#allocation6 + $0x20] sm:$0xf]
        %v424 = vld [vmem:[#allocation6 + $0x24] sm:$0xf]
        %v425 = vld [vmem:[#allocation6 + $0x28] sm:$0xf]
        %v426 = vld [vmem:[#allocation6 + $0x2c] sm:$0xf]
        %v427 = vld [vmem:[#allocation6 + $0x30] sm:$0xf]
        %v428 = vld [vmem:[#allocation6 + $0x34] sm:$0xf]
        %v429 = vld [vmem:[#allocation6 + $0x38] sm:$0xf]
        %v430 = vld [vmem:[#allocation6 + $0x3c] sm:$0xf]
        %v431 = vld [vmem:[%s2] sm:$0x1]
        %v433 = vlaneseq
        %v434 = vshrl.u32 %v433, 7
        %v435 = vsub.s32 0, %v434
        %v436 = vrot.slane %v431, %v435
        %v454 = vunpack.c.l.b16 %v399
        %v455 = vunpack.c.l.b16 %v400
        %v456 = vunpack.c.l.b16 %v401
        %v457 = vunpack.c.l.b16 %v402
        %v458 = vunpack.c.l.b16 %v403
        %v459 = vunpack.c.l.b16 %v404
        %v460 = vunpack.c.l.b16 %v405
        %v461 = vunpack.c.l.b16 %v406
        %v462 = vunpack.c.l.b16 %v407
        %v463 = vunpack.c.l.b16 %v408
        %v464 = vunpack.c.l.b16 %v409
        %v465 = vunpack.c.l.b16 %v410
        %v466 = vunpack.c.l.b16 %v411
        %v467 = vunpack.c.l.b16 %v412
        %v468 = vunpack.c.l.b16 %v413
        %v469 = vunpack.c.l.b16 %v414
        %v470 = vpack.c.b16 %v455, %v454
        %v471 = vpack.c.b16 %v457, %v456
        %v472 = vpack.c.b16 %v459, %v458
        %v473 = vpack.c.b16 %v461, %v460
        %v474 = vpack.c.b16 %v463, %v462
        %v475 = vpack.c.b16 %v465, %v464
        %v476 = vpack.c.b16 %v467, %v466
        %v477 = vpack.c.b16 %v469, %v468
        %v502 = vunpack.c.l.b16 %v415
        %v503 = vunpack.c.l.b16 %v416
        %v504 = vunpack.c.l.b16 %v417
        %v505 = vunpack.c.l.b16 %v418
        %v506 = vunpack.c.l.b16 %v419
        %v507 = vunpack.c.l.b16 %v420
        %v508 = vunpack.c.l.b16 %v421
        %v509 = vunpack.c.l.b16 %v422
        %v510 = vunpack.c.l.b16 %v423
        %v511 = vunpack.c.l.b16 %v424
        %v512 = vunpack.c.l.b16 %v425
        %v513 = vunpack.c.l.b16 %v426
        %v514 = vunpack.c.l.b16 %v427
        %v515 = vunpack.c.l.b16 %v428
        %v516 = vunpack.c.l.b16 %v429
        %v517 = vunpack.c.l.b16 %v430
        %v518 = vpack.c.b16 %v503, %v502
        %v519 = vpack.c.b16 %v505, %v504
        %v520 = vpack.c.b16 %v507, %v506
        %v521 = vpack.c.b16 %v509, %v508
        %v522 = vpack.c.b16 %v511, %v510
        %v523 = vpack.c.b16 %v513, %v512
        %v524 = vpack.c.b16 %v515, %v514
        %v525 = vpack.c.b16 %v517, %v516
        %534 = vmatprep.subr.bf16.mxu0 0
        %535 = vmatpush1.bf16.msra.mxu0 %v525
        %536 = vmatprep.subr.bf16.mxu0 0
        %537 = vmatpush1.bf16.msra.mxu0 %v524
        %538 = vmatprep.subr.bf16.mxu0 0
        %539 = vmatpush1.bf16.msra.mxu0 %v523
        %540 = vmatprep.subr.bf16.mxu0 0
        %541 = vmatpush1.bf16.msra.mxu0 %v522
        %542 = vmatprep.subr.bf16.mxu0 0
        %543 = vmatpush1.bf16.msra.mxu0 %v521
        %544 = vmatprep.subr.bf16.mxu0 0
        %545 = vmatpush1.bf16.msra.mxu0 %v520
        %546 = vmatprep.subr.bf16.mxu0 0
        %547 = vmatpush1.bf16.msra.mxu0 %v519
        %548 = vmatprep.subr.bf16.mxu0 0
        %549 = vmatpush1.bf16.msra.mxu0 %v518
        %550 = vmatprep.subr.bf16.mxu0 0
        %551 = vmatpush2.bf16.msra.mxu0 0
        %552 = vmatprep.subr.bf16.mxu0 0
        %553 = vmatpush2.bf16.msra.mxu0 0
        %554 = vmatprep.subr.bf16.mxu0 0
        %555 = vmatpush2.bf16.msra.mxu0 0
        %556 = vmatprep.subr.bf16.mxu0 0
        %557 = vmatpush2.bf16.msra.mxu0 0
        %558 = vmatprep.subr.bf16.mxu0 0
        %559 = vmatpush2.bf16.msra.mxu0 0
        %560 = vmatprep.subr.bf16.mxu0 0
        %561 = vmatpush2.bf16.msra.mxu0 0
        %562 = vmatprep.subr.bf16.mxu0 0
        %563 = vmatpush2.bf16.msra.mxu0 0
        %564 = vmatprep.subr.bf16.mxu0 0
        %565 = vmatpush2.bf16.msra.mxu0 0
        %566 = vmatprep.mubr.bf16.mxu0 0
        %567 = vmatmul.mubr.bf16.gmra.mxu0 %v470
        %v568 = vpop.f32.mrf.mxu0
        %v569 = vadd.f32 %v436, %v568
        %v570 = vpop.f32.mrf.mxu0
        %v571 = vpop.f32.mrf.mxu0
        %v572 = vadd.f32 %v436, %v571
        %v573 = vpop.f32.mrf.mxu0
        %574 = vmatprep.mubr.bf16.mxu0 0
        %575 = vmatmul.mubr.bf16.gmra.mxu0 %v471
        %v576 = vpop.f32.mrf.mxu0
        %v577 = vadd.f32 %v436, %v576
        %v578 = vpop.f32.mrf.mxu0
        %v579 = vpop.f32.mrf.mxu0
        %v580 = vadd.f32 %v436, %v579
        %v581 = vpop.f32.mrf.mxu0
        %582 = vmatprep.mubr.bf16.mxu0 0
        %583 = vmatmul.mubr.bf16.gmra.mxu0 %v472
        %v584 = vpop.f32.mrf.mxu0
        %v585 = vadd.f32 %v436, %v584
        %v586 = vpop.f32.mrf.mxu0
        %v587 = vpop.f32.mrf.mxu0
        %v588 = vadd.f32 %v436, %v587
        %v589 = vpop.f32.mrf.mxu0
        %590 = vmatprep.mubr.bf16.mxu0 0
        %591 = vmatmul.mubr.bf16.gmra.mxu0 %v473
        %v592 = vpop.f32.mrf.mxu0
        %v593 = vadd.f32 %v436, %v592
        %v594 = vpop.f32.mrf.mxu0
        %v595 = vpop.f32.mrf.mxu0
        %v596 = vadd.f32 %v436, %v595
        %v597 = vpop.f32.mrf.mxu0
        %598 = vmatprep.mubr.bf16.mxu0 0
        %599 = vmatmul.mubr.bf16.gmra.mxu0 %v474
        %v600 = vpop.f32.mrf.mxu0
        %v601 = vadd.f32 %v436, %v600
        %v602 = vpop.f32.mrf.mxu0
        %v603 = vpop.f32.mrf.mxu0
        %v604 = vadd.f32 %v436, %v603
        %v605 = vpop.f32.mrf.mxu0
        %606 = vmatprep.mubr.bf16.mxu0 0
        %607 = vmatmul.mubr.bf16.gmra.mxu0 %v475
        %v608 = vpop.f32.mrf.mxu0
        %v609 = vadd.f32 %v436, %v608
        %v610 = vpop.f32.mrf.mxu0
        %v611 = vpop.f32.mrf.mxu0
        %v612 = vadd.f32 %v436, %v611
        %v613 = vpop.f32.mrf.mxu0
        %614 = vmatprep.mubr.bf16.mxu0 0
        %615 = vmatmul.mubr.bf16.gmra.mxu0 %v476
        %v616 = vpop.f32.mrf.mxu0
        %v617 = vadd.f32 %v436, %v616
        %v618 = vpop.f32.mrf.mxu0
        %v619 = vpop.f32.mrf.mxu0
        %v620 = vadd.f32 %v436, %v619
        %v621 = vpop.f32.mrf.mxu0
        %622 = vmatprep.mubr.bf16.mxu0 0
        %623 = vmatmul.mubr.bf16.gmra.mxu0 %v477
        %v624 = vpop.f32.mrf.mxu0
        %v625 = vadd.f32 %v436, %v624
        %v626 = vpop.f32.mrf.mxu0
        %v627 = vpop.f32.mrf.mxu0
        %v628 = vadd.f32 %v436, %v627
        %v629 = vpop.f32.mrf.mxu0
        %630 = vdwg.mxu0
        %v631 = vmax.f32 %v569, 0.0
        %v632 = vmax.f32 %v572, 0.0
        %v633 = vmax.f32 %v577, 0.0
        %v634 = vmax.f32 %v580, 0.0
        %v635 = vmax.f32 %v585, 0.0
        %v636 = vmax.f32 %v588, 0.0
        %v637 = vmax.f32 %v593, 0.0
        %v638 = vmax.f32 %v596, 0.0
        %v639 = vmax.f32 %v601, 0.0
        %v640 = vmax.f32 %v604, 0.0
        %v641 = vmax.f32 %v609, 0.0
        %v642 = vmax.f32 %v612, 0.0
        %v643 = vmax.f32 %v617, 0.0
        %v644 = vmax.f32 %v620, 0.0
        %v645 = vmax.f32 %v625, 0.0
        %v646 = vmax.f32 %v628, 0.0
        %v647 = vpack.c.bf16 %v632, %v631
        %v648 = vpack.c.bf16 %v634, %v633
        %v649 = vpack.c.bf16 %v636, %v635
        %v650 = vpack.c.bf16 %v638, %v637
        %v651 = vpack.c.bf16 %v640, %v639
        %v652 = vpack.c.bf16 %v642, %v641
        %v653 = vpack.c.bf16 %v644, %v643
        %v654 = vpack.c.bf16 %v646, %v645
        %v655 = vld [vmem:[#allocation8] sm:$0xf]
        %v656 = vld [vmem:[#allocation8 + $0x4] sm:$0xf]
        %v657 = vld [vmem:[#allocation8 + $0x8] sm:$0xf]
        %v658 = vld [vmem:[#allocation8 + $0xc] sm:$0xf]
        %v659 = vld [vmem:[#allocation8 + $0x10] sm:$0xf]
        %v660 = vld [vmem:[#allocation8 + $0x14] sm:$0xf]
        %v661 = vld [vmem:[#allocation8 + $0x18] sm:$0xf]
        %v662 = vld [vmem:[#allocation8 + $0x1c] sm:$0xf]
        %v663 = vld [vmem:[#allocation8 + $0x20] sm:$0xf]
        %v664 = vld [vmem:[#allocation8 + $0x24] sm:$0xf]
        %v665 = vld [vmem:[#allocation8 + $0x28] sm:$0xf]
        %v666 = vld [vmem:[#allocation8 + $0x2c] sm:$0xf]
        %v667 = vld [vmem:[#allocation8 + $0x30] sm:$0xf]
        %v668 = vld [vmem:[#allocation8 + $0x34] sm:$0xf]
        %v669 = vld [vmem:[#allocation8 + $0x38] sm:$0xf]
        %v670 = vld [vmem:[#allocation8 + $0x3c] sm:$0xf]
        %v671 = vld [vmem:[%s4] sm:$0x1]
        %v673 = vlaneseq
        %v674 = vshrl.u32 %v673, 7
        %v675 = vsub.s32 0, %v674
        %v676 = vrot.slane %v671, %v675
        %v694 = vunpack.c.l.b16 %v655
        %v695 = vunpack.c.l.b16 %v656
        %v696 = vunpack.c.l.b16 %v657
        %v697 = vunpack.c.l.b16 %v658
        %v698 = vunpack.c.l.b16 %v659
        %v699 = vunpack.c.l.b16 %v660
        %v700 = vunpack.c.l.b16 %v661
        %v701 = vunpack.c.l.b16 %v662
        %v702 = vunpack.c.l.b16 %v663
        %v703 = vunpack.c.l.b16 %v664
        %v704 = vunpack.c.l.b16 %v665
        %v705 = vunpack.c.l.b16 %v666
        %v706 = vunpack.c.l.b16 %v667
        %v707 = vunpack.c.l.b16 %v668
        %v708 = vunpack.c.l.b16 %v669
        %v709 = vunpack.c.l.b16 %v670
        %v710 = vpack.c.b16 %v695, %v694
        %v711 = vpack.c.b16 %v697, %v696
        %v712 = vpack.c.b16 %v699, %v698
        %v713 = vpack.c.b16 %v701, %v700
        %v714 = vpack.c.b16 %v703, %v702
        %v715 = vpack.c.b16 %v705, %v704
        %v716 = vpack.c.b16 %v707, %v706
        %v717 = vpack.c.b16 %v709, %v708
        %726 = vmatprep.subr.bf16.mxu0 0
        %727 = vmatpush1.bf16.msra.mxu0 %v717
        %728 = vmatprep.subr.bf16.mxu0 0
        %729 = vmatpush1.bf16.msra.mxu0 %v716
        %730 = vmatprep.subr.bf16.mxu0 0
        %731 = vmatpush1.bf16.msra.mxu0 %v715
        %732 = vmatprep.subr.bf16.mxu0 0
        %733 = vmatpush1.bf16.msra.mxu0 %v714
        %734 = vmatprep.subr.bf16.mxu0 0
        %735 = vmatpush1.bf16.msra.mxu0 %v713
        %736 = vmatprep.subr.bf16.mxu0 0
        %737 = vmatpush1.bf16.msra.mxu0 %v712
        %738 = vmatprep.subr.bf16.mxu0 0
        %739 = vmatpush1.bf16.msra.mxu0 %v711
        %740 = vmatprep.subr.bf16.mxu0 0
        %741 = vmatpush1.bf16.msra.mxu0 %v710
        %742 = vmatprep.subr.bf16.mxu0 0
        %743 = vmatpush2.bf16.msra.mxu0 0
        %744 = vmatprep.subr.bf16.mxu0 0
        %745 = vmatpush2.bf16.msra.mxu0 0
        %746 = vmatprep.subr.bf16.mxu0 0
        %747 = vmatpush2.bf16.msra.mxu0 0
        %748 = vmatprep.subr.bf16.mxu0 0
        %749 = vmatpush2.bf16.msra.mxu0 0
        %750 = vmatprep.subr.bf16.mxu0 0
        %751 = vmatpush2.bf16.msra.mxu0 0
        %752 = vmatprep.subr.bf16.mxu0 0
        %753 = vmatpush2.bf16.msra.mxu0 0
        %754 = vmatprep.subr.bf16.mxu0 0
        %755 = vmatpush2.bf16.msra.mxu0 0
        %756 = vmatprep.subr.bf16.mxu0 0
        %757 = vmatpush2.bf16.msra.mxu0 0
        %758 = vmatprep.mubr.bf16.mxu0 0
        %759 = vmatmul.mubr.bf16.gmra.mxu0 %v647
        %v760 = vpop.f32.mrf.mxu0
        %v761 = vadd.f32 %v676, %v760
        %v762 = vpop.f32.mrf.mxu0
        %v763 = vpop.f32.mrf.mxu0
        %v764 = vadd.f32 %v676, %v763
        %v765 = vpop.f32.mrf.mxu0
        %766 = vmatprep.mubr.bf16.mxu0 0
        %767 = vmatmul.mubr.bf16.gmra.mxu0 %v648
        %v768 = vpop.f32.mrf.mxu0
        %v769 = vadd.f32 %v676, %v768
        %v770 = vpop.f32.mrf.mxu0
        %v771 = vpop.f32.mrf.mxu0
        %v772 = vadd.f32 %v676, %v771
        %v773 = vpop.f32.mrf.mxu0
        %774 = vmatprep.mubr.bf16.mxu0 0
        %775 = vmatmul.mubr.bf16.gmra.mxu0 %v649
        %v776 = vpop.f32.mrf.mxu0
        %v777 = vadd.f32 %v676, %v776
        %v778 = vpop.f32.mrf.mxu0
        %v779 = vpop.f32.mrf.mxu0
        %v780 = vadd.f32 %v676, %v779
        %v781 = vpop.f32.mrf.mxu0
        %782 = vmatprep.mubr.bf16.mxu0 0
        %783 = vmatmul.mubr.bf16.gmra.mxu0 %v650
        %v784 = vpop.f32.mrf.mxu0
        %v785 = vadd.f32 %v676, %v784
        %v786 = vpop.f32.mrf.mxu0
        %v787 = vpop.f32.mrf.mxu0
        %v788 = vadd.f32 %v676, %v787
        %v789 = vpop.f32.mrf.mxu0
        %790 = vmatprep.mubr.bf16.mxu0 0
        %791 = vmatmul.mubr.bf16.gmra.mxu0 %v651
        %v792 = vpop.f32.mrf.mxu0
        %v793 = vadd.f32 %v676, %v792
        %v794 = vpop.f32.mrf.mxu0
        %v795 = vpop.f32.mrf.mxu0
        %v796 = vadd.f32 %v676, %v795
        %v797 = vpop.f32.mrf.mxu0
        %798 = vmatprep.mubr.bf16.mxu0 0
        %799 = vmatmul.mubr.bf16.gmra.mxu0 %v652
        %v800 = vpop.f32.mrf.mxu0
        %v801 = vadd.f32 %v676, %v800
        %v802 = vpop.f32.mrf.mxu0
        %v803 = vpop.f32.mrf.mxu0
        %v804 = vadd.f32 %v676, %v803
        %v805 = vpop.f32.mrf.mxu0
        %806 = vmatprep.mubr.bf16.mxu0 0
        %807 = vmatmul.mubr.bf16.gmra.mxu0 %v653
        %v808 = vpop.f32.mrf.mxu0
        %v809 = vadd.f32 %v676, %v808
        %v810 = vpop.f32.mrf.mxu0
        %v811 = vpop.f32.mrf.mxu0
        %v812 = vadd.f32 %v676, %v811
        %v813 = vpop.f32.mrf.mxu0
        %814 = vmatprep.mubr.bf16.mxu0 0
        %815 = vmatmul.mubr.bf16.gmra.mxu0 %v654
        %v816 = vpop.f32.mrf.mxu0
        %v817 = vadd.f32 %v676, %v816
        %v818 = vpop.f32.mrf.mxu0
        %v819 = vpop.f32.mrf.mxu0
        %v820 = vadd.f32 %v676, %v819
        %v821 = vpop.f32.mrf.mxu0
        %822 = vdwg.mxu0
        %v823 = vmax.f32 %v761, 0.0
        %v824 = vmax.f32 %v764, 0.0
        %v825 = vmax.f32 %v769, 0.0
        %v826 = vmax.f32 %v772, 0.0
        %v827 = vmax.f32 %v777, 0.0
        %v828 = vmax.f32 %v780, 0.0
        %v829 = vmax.f32 %v785, 0.0
        %v830 = vmax.f32 %v788, 0.0
        %v831 = vmax.f32 %v793, 0.0
        %v832 = vmax.f32 %v796, 0.0
        %v833 = vmax.f32 %v801, 0.0
        %v834 = vmax.f32 %v804, 0.0
        %v835 = vmax.f32 %v809, 0.0
        %v836 = vmax.f32 %v812, 0.0
        %v837 = vmax.f32 %v817, 0.0
        %v838 = vmax.f32 %v820, 0.0
        %v839 = vpack.c.bf16 %v824, %v823
        %v840 = vpack.c.bf16 %v826, %v825
        %v841 = vpack.c.bf16 %v828, %v827
        %v842 = vpack.c.bf16 %v830, %v829
        %v843 = vpack.c.bf16 %v832, %v831
        %v844 = vpack.c.bf16 %v834, %v833
        %v845 = vpack.c.bf16 %v836, %v835
        %v846 = vpack.c.bf16 %v838, %v837
        %v847 = vld [vmem:[#allocation9] sm:$0xf]
        %v848 = vld [vmem:[#allocation9 + $0x4] sm:$0xf]
        %v849 = vld [vmem:[#allocation9 + $0x8] sm:$0xf]
        %v850 = vld [vmem:[#allocation9 + $0xc] sm:$0xf]
        %v851 = vld [vmem:[#allocation9 + $0x10] sm:$0xf]
        %v852 = vld [vmem:[#allocation9 + $0x14] sm:$0xf]
        %v853 = vld [vmem:[#allocation9 + $0x18] sm:$0xf]
        %v854 = vld [vmem:[#allocation9 + $0x1c] sm:$0xf]
        %v855 = vld [vmem:[#allocation9 + $0x20] sm:$0xf]
        %v856 = vld [vmem:[#allocation9 + $0x24] sm:$0xf]
        %v857 = vld [vmem:[#allocation9 + $0x28] sm:$0xf]
        %v858 = vld [vmem:[#allocation9 + $0x2c] sm:$0xf]
        %v859 = vld [vmem:[#allocation9 + $0x30] sm:$0xf]
        %v860 = vld [vmem:[#allocation9 + $0x34] sm:$0xf]
        %v861 = vld [vmem:[#allocation9 + $0x38] sm:$0xf]
        %v862 = vld [vmem:[#allocation9 + $0x3c] sm:$0xf]
        %v863 = vld [vmem:[%s6] sm:$0x1]
        %v865 = vlaneseq
        %v866 = vshrl.u32 %v865, 7
        %v867 = vsub.s32 0, %v866
        %v868 = vrot.slane %v863, %v867
        %v886 = vunpack.c.l.b16 %v847
        %v887 = vunpack.c.l.b16 %v848
        %v888 = vunpack.c.l.b16 %v849
        %v889 = vunpack.c.l.b16 %v850
        %v890 = vunpack.c.l.b16 %v851
        %v891 = vunpack.c.l.b16 %v852
        %v892 = vunpack.c.l.b16 %v853
        %v893 = vunpack.c.l.b16 %v854
        %v894 = vunpack.c.l.b16 %v855
        %v895 = vunpack.c.l.b16 %v856
        %v896 = vunpack.c.l.b16 %v857
        %v897 = vunpack.c.l.b16 %v858
        %v898 = vunpack.c.l.b16 %v859
        %v899 = vunpack.c.l.b16 %v860
        %v900 = vunpack.c.l.b16 %v861
        %v901 = vunpack.c.l.b16 %v862
        %v902 = vpack.c.b16 %v887, %v886
        %v903 = vpack.c.b16 %v889, %v888
        %v904 = vpack.c.b16 %v891, %v890
        %v905 = vpack.c.b16 %v893, %v892
        %v906 = vpack.c.b16 %v895, %v894
        %v907 = vpack.c.b16 %v897, %v896
        %v908 = vpack.c.b16 %v899, %v898
        %v909 = vpack.c.b16 %v901, %v900
        %918 = vmatprep.subr.bf16.mxu0 0
        %919 = vmatpush1.bf16.msra.mxu0 %v909
        %920 = vmatprep.subr.bf16.mxu0 0
        %921 = vmatpush1.bf16.msra.mxu0 %v908
        %922 = vmatprep.subr.bf16.mxu0 0
        %923 = vmatpush1.bf16.msra.mxu0 %v907
        %924 = vmatprep.subr.bf16.mxu0 0
        %925 = vmatpush1.bf16.msra.mxu0 %v906
        %926 = vmatprep.subr.bf16.mxu0 0
        %927 = vmatpush1.bf16.msra.mxu0 %v905
        %928 = vmatprep.subr.bf16.mxu0 0
        %929 = vmatpush1.bf16.msra.mxu0 %v904
        %930 = vmatprep.subr.bf16.mxu0 0
        %931 = vmatpush1.bf16.msra.mxu0 %v903
        %932 = vmatprep.subr.bf16.mxu0 0
        %933 = vmatpush1.bf16.msra.mxu0 %v902
        %934 = vmatprep.subr.bf16.mxu0 0
        %935 = vmatpush2.bf16.msra.mxu0 0
        %936 = vmatprep.subr.bf16.mxu0 0
        %937 = vmatpush2.bf16.msra.mxu0 0
        %938 = vmatprep.subr.bf16.mxu0 0
        %939 = vmatpush2.bf16.msra.mxu0 0
        %940 = vmatprep.subr.bf16.mxu0 0
        %941 = vmatpush2.bf16.msra.mxu0 0
        %942 = vmatprep.subr.bf16.mxu0 0
        %943 = vmatpush2.bf16.msra.mxu0 0
        %944 = vmatprep.subr.bf16.mxu0 0
        %945 = vmatpush2.bf16.msra.mxu0 0
        %946 = vmatprep.subr.bf16.mxu0 0
        %947 = vmatpush2.bf16.msra.mxu0 0
        %948 = vmatprep.subr.bf16.mxu0 0
        %949 = vmatpush2.bf16.msra.mxu0 0
        %950 = vmatprep.mubr.bf16.mxu0 0
        %951 = vmatmul.mubr.bf16.gmra.mxu0 %v839
        %v952 = vpop.f32.mrf.mxu0
        %v953 = vadd.f32 %v868, %v952
        %v954 = vpop.f32.mrf.mxu0
        %v955 = vpop.f32.mrf.mxu0
        %v956 = vadd.f32 %v868, %v955
        %v957 = vpop.f32.mrf.mxu0
        %958 = vmatprep.mubr.bf16.mxu0 0
        %959 = vmatmul.mubr.bf16.gmra.mxu0 %v840
        %v960 = vpop.f32.mrf.mxu0
        %v961 = vadd.f32 %v868, %v960
        %v962 = vpop.f32.mrf.mxu0
        %v963 = vpop.f32.mrf.mxu0
        %v964 = vadd.f32 %v868, %v963
        %v965 = vpop.f32.mrf.mxu0
        %966 = vmatprep.mubr.bf16.mxu0 0
        %967 = vmatmul.mubr.bf16.gmra.mxu0 %v841
        %v968 = vpop.f32.mrf.mxu0
        %v969 = vadd.f32 %v868, %v968
        %v970 = vpop.f32.mrf.mxu0
        %v971 = vpop.f32.mrf.mxu0
        %v972 = vadd.f32 %v868, %v971
        %v973 = vpop.f32.mrf.mxu0
        %974 = vmatprep.mubr.bf16.mxu0 0
        %975 = vmatmul.mubr.bf16.gmra.mxu0 %v842
        %v976 = vpop.f32.mrf.mxu0
        %v977 = vadd.f32 %v868, %v976
        %v978 = vpop.f32.mrf.mxu0
        %v979 = vpop.f32.mrf.mxu0
        %v980 = vadd.f32 %v868, %v979
        %v981 = vpop.f32.mrf.mxu0
        %982 = vmatprep.mubr.bf16.mxu0 0
        %983 = vmatmul.mubr.bf16.gmra.mxu0 %v843
        %v984 = vpop.f32.mrf.mxu0
        %v985 = vadd.f32 %v868, %v984
        %v986 = vpop.f32.mrf.mxu0
        %v987 = vpop.f32.mrf.mxu0
        %v988 = vadd.f32 %v868, %v987
        %v989 = vpop.f32.mrf.mxu0
        %990 = vmatprep.mubr.bf16.mxu0 0
        %991 = vmatmul.mubr.bf16.gmra.mxu0 %v844
        %v992 = vpop.f32.mrf.mxu0
        %v993 = vadd.f32 %v868, %v992
        %v994 = vpop.f32.mrf.mxu0
        %v995 = vpop.f32.mrf.mxu0
        %v996 = vadd.f32 %v868, %v995
        %v997 = vpop.f32.mrf.mxu0
        %998 = vmatprep.mubr.bf16.mxu0 0
        %999 = vmatmul.mubr.bf16.gmra.mxu0 %v845
        %v1000 = vpop.f32.mrf.mxu0
        %v1001 = vadd.f32 %v868, %v1000
        %v1002 = vpop.f32.mrf.mxu0
        %v1003 = vpop.f32.mrf.mxu0
        %v1004 = vadd.f32 %v868, %v1003
        %v1005 = vpop.f32.mrf.mxu0
        %1006 = vmatprep.mubr.bf16.mxu0 0
        %1007 = vmatmul.mubr.bf16.gmra.mxu0 %v846
        %v1008 = vpop.f32.mrf.mxu0
        %v1009 = vadd.f32 %v868, %v1008
        %v1010 = vpop.f32.mrf.mxu0
        %v1011 = vpop.f32.mrf.mxu0
        %v1012 = vadd.f32 %v868, %v1011
        %v1013 = vpop.f32.mrf.mxu0
        %1014 = vdwg.mxu0
        %v1015 = vmax.f32 %v953, 0.0
        %v1016 = vmax.f32 %v956, 0.0
        %v1017 = vmax.f32 %v961, 0.0
        %v1018 = vmax.f32 %v964, 0.0
        %v1019 = vmax.f32 %v969, 0.0
        %v1020 = vmax.f32 %v972, 0.0
        %v1021 = vmax.f32 %v977, 0.0
        %v1022 = vmax.f32 %v980, 0.0
        %v1023 = vmax.f32 %v985, 0.0
        %v1024 = vmax.f32 %v988, 0.0
        %v1025 = vmax.f32 %v993, 0.0
        %v1026 = vmax.f32 %v996, 0.0
        %v1027 = vmax.f32 %v1001, 0.0
        %v1028 = vmax.f32 %v1004, 0.0
        %v1029 = vmax.f32 %v1009, 0.0
        %v1030 = vmax.f32 %v1012, 0.0
        %v1031 = vld [vmem:[%s7] sm:$0x1]
        %v1033 = vlaneseq
        %v1034 = vshrl.u32 %v1033, 7
        %v1035 = vsub.s32 0, %v1034
        %v1036 = vrot.slane %v1031, %v1035
        %v1038 = vmul.f32 %v1015, %v1036
        %v1039 = vmul.f32 %v1016, %v1036
        %v1040 = vmul.f32 %v1017, %v1036
        %v1041 = vmul.f32 %v1018, %v1036
        %v1042 = vmul.f32 %v1019, %v1036
        %v1043 = vmul.f32 %v1020, %v1036
        %v1044 = vmul.f32 %v1021, %v1036
        %v1045 = vmul.f32 %v1022, %v1036
        %v1046 = vmul.f32 %v1023, %v1036
        %v1047 = vmul.f32 %v1024, %v1036
        %v1048 = vmul.f32 %v1025, %v1036
        %v1049 = vmul.f32 %v1026, %v1036
        %v1050 = vmul.f32 %v1027, %v1036
        %v1051 = vmul.f32 %v1028, %v1036
        %v1052 = vmul.f32 %v1029, %v1036
        %v1053 = vmul.f32 %v1030, %v1036
        %1054 = vadd.xlane.f32.xlu0 %v1038
        %v1055 = vpop.xlane.xlu0 %1054
        %1056 = vadd.xlane.f32.xlu0 %v1039
        %v1057 = vpop.xlane.xlu0 %1056
        %1058 = vadd.xlane.f32.xlu0 %v1040
        %v1059 = vpop.xlane.xlu0 %1058
        %1060 = vadd.xlane.f32.xlu0 %v1041
        %v1061 = vpop.xlane.xlu0 %1060
        %1062 = vadd.xlane.f32.xlu0 %v1042
        %v1063 = vpop.xlane.xlu0 %1062
        %1064 = vadd.xlane.f32.xlu0 %v1043
        %v1065 = vpop.xlane.xlu0 %1064
        %1066 = vadd.xlane.f32.xlu0 %v1044
        %v1067 = vpop.xlane.xlu0 %1066
        %1068 = vadd.xlane.f32.xlu0 %v1045
        %v1069 = vpop.xlane.xlu0 %1068
        %1070 = vadd.xlane.f32.xlu0 %v1046
        %v1071 = vpop.xlane.xlu0 %1070
        %1072 = vadd.xlane.f32.xlu0 %v1047
        %v1073 = vpop.xlane.xlu0 %1072
        %1074 = vadd.xlane.f32.xlu0 %v1048
        %v1075 = vpop.xlane.xlu0 %1074
        %1076 = vadd.xlane.f32.xlu0 %v1049
        %v1077 = vpop.xlane.xlu0 %1076
        %1078 = vadd.xlane.f32.xlu0 %v1050
        %v1079 = vpop.xlane.xlu0 %1078
        %1080 = vadd.xlane.f32.xlu0 %v1051
        %v1081 = vpop.xlane.xlu0 %1080
        %1082 = vadd.xlane.f32.xlu0 %v1052
        %v1083 = vpop.xlane.xlu0 %1082
        %1084 = vadd.xlane.f32.xlu0 %v1053
        %v1085 = vpop.xlane.xlu0 %1084
        %s1086 = sld [smem:[#allocation2]]
        %v1087 = vstv %s1086
        %v1088 = vadd.f32 %v1055, %v1087
        %v1089 = vadd.f32 %v1057, %v1087
        %v1090 = vadd.f32 %v1059, %v1087
        %v1091 = vadd.f32 %v1061, %v1087
        %v1092 = vadd.f32 %v1063, %v1087
        %v1093 = vadd.f32 %v1065, %v1087
        %v1094 = vadd.f32 %v1067, %v1087
        %v1095 = vadd.f32 %v1069, %v1087
        %v1096 = vadd.f32 %v1071, %v1087
        %v1097 = vadd.f32 %v1073, %v1087
        %v1098 = vadd.f32 %v1075, %v1087
        %v1099 = vadd.f32 %v1077, %v1087
        %v1100 = vadd.f32 %v1079, %v1087
        %v1101 = vadd.f32 %v1081, %v1087
        %v1102 = vadd.f32 %v1083, %v1087
        %v1103 = vadd.f32 %v1085, %v1087
        %1104 = vst [vmem:[%s395] sm:$0xff] %v1088
        %1105 = vst [vmem:[%s395 + $0x8] sm:$0xff] %v1089
        %1106 = vst [vmem:[%s395 + $0x10] sm:$0xff] %v1090
        %1107 = vst [vmem:[%s395 + $0x18] sm:$0xff] %v1091
        %1108 = vst [vmem:[%s395 + $0x20] sm:$0xff] %v1092
        %1109 = vst [vmem:[%s395 + $0x28] sm:$0xff] %v1093
        %1110 = vst [vmem:[%s395 + $0x30] sm:$0xff] %v1094
        %1111 = vst [vmem:[%s395 + $0x38] sm:$0xff] %v1095
        %1112 = vst [vmem:[%s395 + $0x40] sm:$0xff] %v1096
        %1113 = vst [vmem:[%s395 + $0x48] sm:$0xff] %v1097
        %1114 = vst [vmem:[%s395 + $0x50] sm:$0xff] %v1098
        %1115 = vst [vmem:[%s395 + $0x58] sm:$0xff] %v1099
        %1116 = vst [vmem:[%s395 + $0x60] sm:$0xff] %v1100
        %1117 = vst [vmem:[%s395 + $0x68] sm:$0xff] %v1101
        %1118 = vst [vmem:[%s395 + $0x70] sm:$0xff] %v1102
        %1119 = vst [vmem:[%s395 + $0x78] sm:$0xff] %v1103
        %s1120 = sand.u32 %s231, 1
        %s1121 = scalar_lea.sflag [#allocation5], %s1120
        %s1122 = sand.u32 %s231, 1
        %s1123 = smul.addr %s1122, 128
        %s1124 = scalar_lea.vmem [#allocation11], %s1123
        // Predicated region
        $region73: #{tpu_custom_call.1} parent=55 // pred_check
          %p1125 = pneg %p241
        $region74: #{tpu_custom_call.1} parent=55 // pred_check_branch
          %1127 = sbr.rel (%p1125) target = $region76
        $region75: #{tpu_custom_call.1} parent=55 // pred_region
          %s1128 = smul.u32 16, %s29
          %s1130 = ssub.s32 2048, 2048
          %1131 = vsyncadd %s1121, %s1130
          %s1132 = smul.addr %s1128, 128
          %s1133 = scalar_lea.hbm %s9, %s1132
          %s1134 = sshll.u32 %s1124, 4
          %s1135 = int_to_ptr.vmem [resolvable:$true] %s1134
          %1140 = dma.vmem_to_hbm [thread:$0]  %s1135, 2048, %s1133, %s1121, 128, 128, 8
        $region76: #{tpu_custom_call.1} parent=55 // pred_fallthru
          _
      $region56: #{tpu_custom_call.1} parent=5 // pred_fallthru
        _
      %p1141 = scmp.le.s32.totalorder 2, %s24
      // Predicated region
      $region77: #{tpu_custom_call.1} parent=5 // pred_check
        %p1142 = pneg %p1141
      $region78: #{tpu_custom_call.1} parent=5 // pred_check_branch
        %1144 = sbr.rel (%p1142) target = $region80
      $region79: #{tpu_custom_call.1} parent=5 // pred_region
        %s1145 = ssub.s32 %s24, 2
        // Predicated region
        $region81: #{tpu_custom_call.1} parent=79 // pred_check
          %p1146 = pneg %p247
        $region82: #{tpu_custom_call.1} parent=79 // pred_check_branch
          %1148 = sbr.rel (%p1146) target = $region84
        $region83: #{tpu_custom_call.1} parent=79 // pred_region
          %s1149 = sand.u32 %s232, 1
          %s1150 = scalar_lea.sflag [#allocation5], %s1149
          %s1151 = sand.u32 %s232, 1
          %s1152 = smul.addr %s1151, 128
          %s1153 = scalar_lea.vmem [#allocation11], %s1152
          %1154 = dma.done %s1150, 2048
        $region84: #{tpu_custom_call.1} parent=79 // pred_fallthru
          _
      $region80: #{tpu_custom_call.1} parent=5 // pred_fallthru
        _
    $region6: #{tpu_custom_call.1} parent=1 // loop_footer
      %s28 = sadd.s32 1, %s24
    $region7: #{tpu_custom_call.1} parent=1 // loop_footer_branch
      %23 = sbr.rel target = $region3
    $region8: #{tpu_custom_call.1} parent=1 // loop_exit
      _
    %1155 = vsyncpa [#allocation4], 1
    %s1156 = scalar_lea.sflag [#allocation4], 1
    %1157 = vsyncpa %s1156, 1
    %1158 = vsyncpa [#allocation7], 1
    %1159 = vsyncpa [#allocation10], 1
    %1160 = vsyncpa [#allocation5], 1
    %s1161 = scalar_lea.sflag [#allocation5], 1
    %1162 = vsyncpa %s1161, 1

</llo_original>
